<compile_context>
chip_gen: v6e
topology: v6e:2x2x1
jax: 0.10.0
libtpu: 0.0.40
codegen_flags: <defaults>
</compile_context>

<pallas_src>
import functools

import jax
import jax.numpy as jnp
from jax.experimental import pallas as pl
from jax.experimental.pallas import tpu as pltpu


def _round_up(x: int, m: int) -> int:
  return ((x + m - 1) // m) * m


def _linear_kernel(x_ref, w_ref, b_ref, o_ref, acc_ref):
  # x_ref: (tm, tk)  activations
  # w_ref: (tn, tk)  weight in PyTorch (out, in) layout -- no transpose needed
  # b_ref: (1, tn)   bias
  # o_ref: (tm, tn)  output tile
  # acc_ref: (tm, tn) f32 accumulator, resident across the K grid axis
  k = pl.program_id(2)

  @pl.when(k == 0)
  def _():
    acc_ref[...] = jnp.zeros_like(acc_ref)

  # Contract x's dim 1 with w's dim 1  ==  x @ w.T  on the MXU, f32 accumulate.
  acc_ref[...] += jax.lax.dot_general(
      x_ref[...], w_ref[...],
      dimension_numbers=(((1,), (1,)), ((), ())),
      preferred_element_type=jnp.float32)

  @pl.when(k == pl.num_programs(2) - 1)
  def _():
    # Bias add + downcast only once, in the finalize step.
    o_ref[...] = (acc_ref[...] + b_ref[...]).astype(o_ref.dtype)


@functools.partial(jax.jit, static_argnames=("tm", "tn", "tk"))
def linear_forward(x, weight, bias, *, tm=256, tn=256, tk=512):
  """Equivalent of torch.nn.Linear(input_dim, output_dim)(x).

  x:      (batch, input_dim)        float32
  weight: (output_dim, input_dim)   float32  (PyTorch layout, NOT transposed)
  bias:   (output_dim,)             float32
  returns (batch, output_dim)       float32
  """
  m, k_dim = x.shape
  n = weight.shape[0]

  # Clamp tiles to the (padded) problem size; keep lane dims 128-aligned and
  # the sublane dim 8-aligned so every block satisfies the (8, 128) rule.
  tm = min(tm, _round_up(m, 8))
  tn = min(tn, _round_up(n, 128))
  tk = min(tk, _round_up(k_dim, 128))

  m_pad = _round_up(m, tm)
  n_pad = _round_up(n, tn)
  k_pad = _round_up(k_dim, tk)

  # Zero-pad (zeros along K contribute nothing; extra M rows / N cols are
  # sliced off at the end). No transpose of the weight anywhere.
  if (m_pad, k_pad) != (m, k_dim):
    x = jnp.pad(x, ((0, m_pad - m), (0, k_pad - k_dim)))
  if (n_pad, k_pad) != (n, k_dim):
    weight = jnp.pad(weight, ((0, n_pad - n), (0, k_pad - k_dim)))
  b2d = bias
  if n_pad != n:
    b2d = jnp.pad(b2d, ((0, n_pad - n),))
  b2d = b2d.reshape(1, n_pad)

  grid = (m_pad // tm, n_pad // tn, k_pad // tk)

  out_padded = pl.pallas_call(
      _linear_kernel,
      out_shape=jax.ShapeDtypeStruct((m_pad, n_pad), x.dtype),
      grid_spec=pltpu.PrefetchScalarGridSpec(
          num_scalar_prefetch=0,
          grid=grid,
          in_specs=[
              pl.BlockSpec((tm, tk), lambda i, j, k: (i, k)),   # x
              pl.BlockSpec((tn, tk), lambda i, j, k: (j, k)),   # weight (out,in)
              pl.BlockSpec((1, tn), lambda i, j, k: (0, j)),    # bias
          ],
          out_specs=pl.BlockSpec((tm, tn), lambda i, j, k: (i, j)),
          scratch_shapes=[pltpu.VMEM((tm, tn), jnp.float32)],
      ),
      compiler_params=pltpu.CompilerParams(
          dimension_semantics=("parallel", "parallel", "arbitrary"),
          # ~3 MiB of tiles at the default sizes; 32 MiB leaves plenty of
          # headroom even against v7x's 64 MiB physical VMEM.
          vmem_limit_bytes=32 * 1024 * 1024,
      ),
  )(x, weight, b2d)

  if (m_pad, n_pad) != (m, n):
    out_padded = out_padded[:m, :n]
  return out_padded


if __name__ == "__main__":
  # Deterministic parameters / inputs (small shapes matching the test module).
  batch, input_dim, output_dim = 8, 32, 16

  key = jax.random.PRNGKey(0)
  kx, kw, kb = jax.random.split(key, 3)
  x = jax.random.normal(kx, (batch, input_dim), dtype=jnp.float32)
  weight = jax.random.normal(kw, (output_dim, input_dim), dtype=jnp.float32) * 0.1
  bias = jax.random.normal(kb, (output_dim,), dtype=jnp.float32) * 0.1

  out = linear_forward(x, weight, bias)
  jax.block_until_ready(out)

  # Reference check (plain JAX) — must match nn.Linear semantics.
  ref = x @ weight.T + bias
  assert out.shape == (batch, output_dim)
  assert jnp.allclose(out, ref, atol=1e-5, rtol=1e-5)

  print("KERNEL_OK")
</pallas_src>

<mosaic_0001>
module attributes {stable_mosaic.version = 11 : i64} {
  func.func @_linear_kernel(%arg0: i32, %arg1: i32, %arg2: i32, %arg3: memref<8x128xf32, #tpu.memory_space<vmem>>, %arg4: memref<128x128xf32, #tpu.memory_space<vmem>>, %arg5: memref<1x128xf32, #tpu.memory_space<vmem>>, %arg6: memref<8x128xf32, #tpu.memory_space<vmem>>, %arg7: memref<8x128xf32, #tpu.memory_space<vmem>>) attributes {dimension_semantics = [#tpu.dimension_semantics<parallel>, #tpu.dimension_semantics<parallel>, #tpu.dimension_semantics<arbitrary>], iteration_bounds = array<i64: 1, 1, 1>, scalar_prefetch = 0 : i64, scratch_operands = 1 : i64, tpu.core_type = #tpu.core_type<tc>, window_params = [{transform_indices = @transform_0, window_bounds = array<i64: 8, 128>}, {transform_indices = @transform_1, window_bounds = array<i64: 128, 128>}, {transform_indices = @transform_2, window_bounds = array<i64: 1, 128>}, {transform_indices = @transform_3, window_bounds = array<i64: 8, 128>}]} {
    %c0_i32 = arith.constant 0 : i32
    %0 = arith.cmpi eq, %arg2, %c0_i32 : i32
    %1 = arith.extui %0 : i1 to i32
    %c0_i32_0 = arith.constant 0 : i32
    %2 = arith.cmpi ne, %1, %c0_i32_0 : i32
    scf.if %2 {
      %cst_10 = arith.constant 0.000000e+00 : f32
      %12 = vector.broadcast %cst_10 : f32 to vector<8x128xf32>
      %c0_11 = arith.constant 0 : index
      %c0_12 = arith.constant 0 : index
      %13 = vector.load %arg7[%c0_11, %c0_12] : memref<8x128xf32, #tpu.memory_space<vmem>>, vector<8x128xf32>
      tpu.vector_store %arg7[%c0_11, %c0_12], %12 {strides = array<i32>} : memref<8x128xf32, #tpu.memory_space<vmem>>, vector<8x128xf32>,
    } else {
    }
    %c0 = arith.constant 0 : index
    %c0_1 = arith.constant 0 : index
    %3 = vector.load %arg7[%c0, %c0_1] : memref<8x128xf32, #tpu.memory_space<vmem>>, vector<8x128xf32>
    %c0_2 = arith.constant 0 : index
    %c0_3 = arith.constant 0 : index
    %4 = vector.load %arg3[%c0_2, %c0_3] : memref<8x128xf32, #tpu.memory_space<vmem>>, vector<8x128xf32>
    %c0_4 = arith.constant 0 : index
    %c0_5 = arith.constant 0 : index
    %5 = vector.load %arg4[%c0_4, %c0_5] : memref<128x128xf32, #tpu.memory_space<vmem>>, vector<128x128xf32>
    %cst = arith.constant dense<0.000000e+00> : vector<8x128xf32>
    %6 = tpu.matmul %4, %5, %cst {dimension_numbers = #tpu.dot_dimension_numbers<[1], [1], [0], [0], [0, 0, 1, 0], [], []>} : vector<8x128xf32>, vector<128x128xf32>, vector<8x128xf32> -> vector<8x128xf32>
    %7 = arith.addf %3, %6 : vector<8x128xf32>
    %c0_6 = arith.constant 0 : index
    %c0_7 = arith.constant 0 : index
    %8 = vector.load %arg7[%c0_6, %c0_7] : memref<8x128xf32, #tpu.memory_space<vmem>>, vector<8x128xf32>
    tpu.vector_store %arg7[%c0_6, %c0_7], %7 {strides = array<i32>} : memref<8x128xf32, #tpu.memory_space<vmem>>, vector<8x128xf32>,
    %c0_i32_8 = arith.constant 0 : i32
    %9 = arith.cmpi eq, %arg2, %c0_i32_8 : i32
    %10 = arith.extui %9 : i1 to i32
    %c0_i32_9 = arith.constant 0 : i32
    %11 = arith.cmpi ne, %10, %c0_i32_9 : i32
    scf.if %11 {
      %c0_10 = arith.constant 0 : index
      %c0_11 = arith.constant 0 : index
      %12 = vector.load %arg7[%c0_10, %c0_11] : memref<8x128xf32, #tpu.memory_space<vmem>>, vector<8x128xf32>
      %c0_12 = arith.constant 0 : index
      %c0_13 = arith.constant 0 : index
      %13 = vector.load %arg5[%c0_12, %c0_13] : memref<1x128xf32, #tpu.memory_space<vmem>>, vector<1x128xf32>
      %14 = vector.broadcast %13 : vector<1x128xf32> to vector<8x128xf32>
      %15 = arith.addf %12, %14 : vector<8x128xf32>
      %c0_14 = arith.constant 0 : index
      %c0_15 = arith.constant 0 : index
      %16 = vector.load %arg6[%c0_14, %c0_15] : memref<8x128xf32, #tpu.memory_space<vmem>>, vector<8x128xf32>
      tpu.vector_store %arg6[%c0_14, %c0_15], %15 {strides = array<i32>} : memref<8x128xf32, #tpu.memory_space<vmem>>, vector<8x128xf32>,
    } else {
    }
    return
  }
  func.func @transform_0(%arg0: i32, %arg1: i32, %arg2: i32) -> (i32, i32) {
    %c0_i32 = arith.constant 0 : i32
    return %arg0, %arg2 : i32, i32
  }
  func.func @transform_1(%arg0: i32, %arg1: i32, %arg2: i32) -> (i32, i32) {
    %c0_i32 = arith.constant 0 : i32
    return %arg1, %arg2 : i32, i32
  }
  func.func @transform_2(%arg0: i32, %arg1: i32, %arg2: i32) -> (i32, i32) {
    %c0_i32 = arith.constant 0 : i32
    %c0_i32_0 = arith.constant 0 : i32
    return %c0_i32, %arg1 : i32, i32
  }
  func.func @transform_3(%arg0: i32, %arg1: i32, %arg2: i32) -> (i32, i32) {
    %c0_i32 = arith.constant 0 : i32
    return %arg0, %arg1 : i32, i32
  }
}

</mosaic_0001>

<llo_original>
// kernel: linear_forward.1
$region0: #{linear_forward.1}
  #allocation0 [shape = 'u32[]', space=smem, size = 0x4, offset = 0x4, fixed_abs, tag = 'smem constant byte address 0x4 - core index']
  #allocation1 [shape = 'u32[144,128]{1,0:T(1,128)}', space=vmem, size = 0x12000, scoped, tag = 'internal scratch']
  #allocation2 [shape = 'f32[8,128]{1,0:T(8,128)}', space=vmem, size = 0x1000, scoped, tag = 'scratch operand']
  %s0 = inlined_call_operand.vmem [shape: f32[8,128], index: 0, kind: input, shape index: {}]
  %s1 = inlined_call_operand.vmem [shape: f32[128,128], index: 1, kind: input, shape index: {}]
  %s2 = inlined_call_operand.vmem [shape: f32[1,128], index: 2, kind: input, shape index: {}]
  %s3 = inlined_call_operand.hbm [shape: f32[8,128], index: 3, kind: output, shape index: {}]
  %s4 = sld [smem:[#allocation0]]
  $region30: #{linear_forward.1} parent=0
    _
  %s6 = ssub.s32 1, %s4
  %s7 = scalar_select 0, %s6, %s4
  $region1: #{linear_forward.1} parent=0
    #allocation3 [shape = 'u8[4096]{0}', space=vmem, size = 0x1000, scoped, tag = 'output window, operand 0, single buffered']
    #allocation4 [shape = 's32[1]{0}', space=sflag, size = 0x4, scoped, tag = 'scoped memory for linear_forward.1']
    %8 = vsyncpa [#allocation4], 0
    // Predicated region
    $region2: #{linear_forward.1} parent=1 // pred_check
      _
    $region3: #{linear_forward.1} parent=1 // pred_check_branch
      %10 = sbr.rel (0) target = $region5
    $region4: #{linear_forward.1} parent=1 // pred_region
      _
    $region5: #{linear_forward.1} parent=1 // pred_fallthru
      _
    // Predicated region
    $region6: #{linear_forward.1} parent=1 // pred_check
      _
    $region7: #{linear_forward.1} parent=1 // pred_check_branch
      %12 = sbr.rel (0) target = $region9
    $region8: #{linear_forward.1} parent=1 // pred_region
      _
    $region9: #{linear_forward.1} parent=1 // pred_fallthru
      _
    // Predicated region
    $region10: #{linear_forward.1} parent=1 // pred_check
      _
    $region11: #{linear_forward.1} parent=1 // pred_check_branch
      %14 = sbr.rel (0) target = $region13
    $region12: #{linear_forward.1} parent=1 // pred_region
      _
    $region13: #{linear_forward.1} parent=1 // pred_fallthru
      _
    %p15 = scmp.eq.s32.totalorder 0, 0
    // Predicated region
    $region14: #{linear_forward.1} parent=1 // pred_check
      %p16 = pneg %p15
    $region15: #{linear_forward.1} parent=1 // pred_check_branch
      %18 = sbr.rel (%p16) target = $region17
    $region16: #{linear_forward.1} parent=1 // pred_region
      %19 = vst [vmem:[#allocation2] sm:$0xff] 0.0
    $region17: #{linear_forward.1} parent=1 // pred_fallthru
      _
    %v20 = vld [vmem:[#allocation2] sm:$0xff]
    %v21 = vld [vmem:[%s0] sm:$0xff]
    %v22 = vld [vmem:[%s1] sm:$0xff]
    %v23 = vld [vmem:[%s1 + $0x8] sm:$0xff]
    %v24 = vld [vmem:[%s1 + $0x10] sm:$0xff]
    %v25 = vld [vmem:[%s1 + $0x18] sm:$0xff]
    %v26 = vld [vmem:[%s1 + $0x20] sm:$0xff]
    %v27 = vld [vmem:[%s1 + $0x28] sm:$0xff]
    %v28 = vld [vmem:[%s1 + $0x30] sm:$0xff]
    %v29 = vld [vmem:[%s1 + $0x38] sm:$0xff]
    %v30 = vld [vmem:[%s1 + $0x40] sm:$0xff]
    %v31 = vld [vmem:[%s1 + $0x48] sm:$0xff]
    %v32 = vld [vmem:[%s1 + $0x50] sm:$0xff]
    %v33 = vld [vmem:[%s1 + $0x58] sm:$0xff]
    %v34 = vld [vmem:[%s1 + $0x60] sm:$0xff]
    %v35 = vld [vmem:[%s1 + $0x68] sm:$0xff]
    %v36 = vld [vmem:[%s1 + $0x70] sm:$0xff]
    %v37 = vld [vmem:[%s1 + $0x78] sm:$0xff]
    %38 = vmatprep.subr.mxu0 0.0
    %39 = vmatpush1.xpose.msra.mxu0 %v37
    %40 = vmatprep.subr.mxu0 0.0
    %41 = vmatpush1.xpose.msra.mxu0 %v36
    %42 = vmatprep.subr.mxu0 0.0
    %43 = vmatpush1.xpose.msra.mxu0 %v35
    %44 = vmatprep.subr.mxu0 0.0
    %45 = vmatpush1.xpose.msra.mxu0 %v34
    %46 = vmatprep.subr.mxu0 0.0
    %47 = vmatpush1.xpose.msra.mxu0 %v33
    %48 = vmatprep.subr.mxu0 0.0
    %49 = vmatpush1.xpose.msra.mxu0 %v32
    %50 = vmatprep.subr.mxu0 0.0
    %51 = vmatpush1.xpose.msra.mxu0 %v31
    %52 = vmatprep.subr.mxu0 0.0
    %53 = vmatpush1.xpose.msra.mxu0 %v30
    %54 = vmatprep.subr.mxu0 0.0
    %55 = vmatpush1.xpose.msra.mxu0 %v29
    %56 = vmatprep.subr.mxu0 0.0
    %57 = vmatpush1.xpose.msra.mxu0 %v28
    %58 = vmatprep.subr.mxu0 0.0
    %59 = vmatpush1.xpose.msra.mxu0 %v27
    %60 = vmatprep.subr.mxu0 0.0
    %61 = vmatpush1.xpose.msra.mxu0 %v26
    %62 = vmatprep.subr.mxu0 0.0
    %63 = vmatpush1.xpose.msra.mxu0 %v25
    %64 = vmatprep.subr.mxu0 0.0
    %65 = vmatpush1.xpose.msra.mxu0 %v24
    %66 = vmatprep.subr.mxu0 0.0
    %67 = vmatpush1.xpose.msra.mxu0 %v23
    %68 = vmatprep.subr.mxu0 0.0
    %69 = vmatpush1.xpose.msra.mxu0 %v22
    %70 = vmatprep.subr.mxu0 0.0
    %71 = vmatpush2.xpose.msra.mxu0 0.0
    %72 = vmatprep.subr.mxu0 0.0
    %73 = vmatpush2.xpose.msra.mxu0 0.0
    %74 = vmatprep.subr.mxu0 0.0
    %75 = vmatpush2.xpose.msra.mxu0 0.0
    %76 = vmatprep.subr.mxu0 0.0
    %77 = vmatpush2.xpose.msra.mxu0 0.0
    %78 = vmatprep.subr.mxu0 0.0
    %79 = vmatpush2.xpose.msra.mxu0 0.0
    %80 = vmatprep.subr.mxu0 0.0
    %81 = vmatpush2.xpose.msra.mxu0 0.0
    %82 = vmatprep.subr.mxu0 0.0
    %83 = vmatpush2.xpose.msra.mxu0 0.0
    %84 = vmatprep.subr.mxu0 0.0
    %85 = vmatpush2.xpose.msra.mxu0 0.0
    %86 = vmatprep.subr.mxu0 0.0
    %87 = vmatpush2.xpose.msra.mxu0 0.0
    %88 = vmatprep.subr.mxu0 0.0
    %89 = vmatpush2.xpose.msra.mxu0 0.0
    %90 = vmatprep.subr.mxu0 0.0
    %91 = vmatpush2.xpose.msra.mxu0 0.0
    %92 = vmatprep.subr.mxu0 0.0
    %93 = vmatpush2.xpose.msra.mxu0 0.0
    %94 = vmatprep.subr.mxu0 0.0
    %95 = vmatpush2.xpose.msra.mxu0 0.0
    %96 = vmatprep.subr.mxu0 0.0
    %97 = vmatpush2.xpose.msra.mxu0 0.0
    %98 = vmatprep.subr.mxu0 0.0
    %99 = vmatpush2.xpose.msra.mxu0 0.0
    %100 = vmatprep.subr.mxu0 0.0
    %101 = vmatpush2.xpose.msra.mxu0 0.0
    %102 = vmatprep.mubr.f32.mxu0 0.0
    %103 = vmatmul.mubr.f32.gmra.mxu0 %v21
    %v104 = vpop.f32.mrf.mxu0
    %v105 = vadd.f32 0.0, %v104
    %v106 = vpop.f32.mrf.mxu0
    %107 = vdwg.mxu0
    %v108 = vadd.f32 %v20, %v105
    %109 = vst [vmem:[#allocation2] sm:$0xff] %v108
    // Predicated region
    $region18: #{linear_forward.1} parent=1 // pred_check
      %p110 = pneg %p15
    $region19: #{linear_forward.1} parent=1 // pred_check_branch
      %112 = sbr.rel (%p110) target = $region21
    $region20: #{linear_forward.1} parent=1 // pred_region
      %v113 = vld [vmem:[#allocation2] sm:$0xff]
      %v114 = vld [vmem:[%s2] sm:$0x1]
      %v116 = vlaneseq
      %v117 = vshrl.u32 %v116, 7
      %v118 = vsub.s32 0, %v117
      %v119 = vrot.slane %v114, %v118
      %v121 = vadd.f32 %v113, %v119
      %122 = vst [vmem:[#allocation3] sm:$0xff] %v121
    $region21: #{linear_forward.1} parent=1 // pred_fallthru
      _
    // Predicated region
    $region22: #{linear_forward.1} parent=1 // pred_check
      _
    $region23: #{linear_forward.1} parent=1 // pred_check_branch
      %124 = sbr.rel (0) target = $region25
    $region24: #{linear_forward.1} parent=1 // pred_region
      %s126 = ssub.s32 128, 128
      %127 = vsyncadd [#allocation4], %s126
      %s129 = sshll.u32 [#allocation3], 4
      %s130 = int_to_ptr.vmem [resolvable:$true] %s129
      %132 = dma.vmem_to_hbm [thread:$0]  %s130, 128, %s3, [#allocation4]
    $region25: #{linear_forward.1} parent=1 // pred_fallthru
      _
    // Predicated region
    $region26: #{linear_forward.1} parent=1 // pred_check
      _
    $region27: #{linear_forward.1} parent=1 // pred_check_branch
      %134 = sbr.rel (0) target = $region29
    $region28: #{linear_forward.1} parent=1 // pred_region
      %135 = dma.done [#allocation4], 128
    $region29: #{linear_forward.1} parent=1 // pred_fallthru
      _
    %136 = vsyncpa [#allocation4], 1

</llo_original>
